<compile_context>
chip_gen: v6e
topology: v6e:2x2x1
jax: 0.10.0
libtpu: 0.0.40
codegen_flags: <defaults>
</compile_context>

<pallas_src>
import functools

import jax
import jax.numpy as jnp
from jax import lax
from jax.experimental import pallas as pl
from jax.experimental.pallas import tpu as pltpu

_LANE = 128
_SUB = 8


def _round_up(v, m):
    return -(-v // m) * m


def _device_kind():
    try:
        return jax.devices()[0].device_kind.lower()
    except Exception:
        return ""


def _gen_config(kind):
    """(default tile rows, vmem_limit_bytes, tensorcores to shard over)."""
    if "v7" in kind:
        # 16384*128*4 = 8 MiB/tile f32 -> 32 MiB double-buffered inputs;
        # 48 MiB scoped limit keeps ~16 MiB headroom under the 64 MiB/TC cap.
        return 16384, 48 * 1024 * 1024, 2
    if "v6" in kind:
        # 4 MiB/tile f32 -> 16 MiB double-buffered; plenty under 128 MiB phys.
        return 8192, 64 * 1024 * 1024, 1
    # v5e / v5p / v4 / unknown: conservative.
    return 4096, 32 * 1024 * 1024, 1


def _l1_sum_kernel(x_ref, y_ref, o_ref, *, tm, total_rows, steps_per_core,
                   acc_rows, need_mask):
    """Accumulate sum(|x - y|) into a per-core (acc_rows, 128) f32 block."""
    c = pl.program_id(0)          # core / partial-sum index ("parallel")
    i = pl.program_id(1)          # sequential reduction step ("arbitrary")
    b = c * steps_per_core + i    # global row-block index

    @pl.when(i == 0)
    def _():
        # Output block index depends only on c, so it stays resident in VMEM
        # across the inner axis and acts as the accumulator.
        o_ref[...] = jnp.zeros_like(o_ref)

    diff = jnp.abs(x_ref[...].astype(jnp.float32) - y_ref[...].astype(jnp.float32))

    def _accum(d):
        # (tm,128) -> (tm//acc_rows, acc_rows, 128): summing over axis 0 is
        # plain vreg-wise VPU adds (no XLU reduce in the hot loop), with
        # acc_rows/8 independent add chains for VALU ILP.
        o_ref[...] += d.reshape(-1, acc_rows, _LANE).sum(axis=0)

    if need_mask:
        is_full = (b + 1) * tm <= total_rows

        @pl.when(is_full)
        def _():
            _accum(diff)

        @pl.when(jnp.logical_not(is_full))
        def _():
            # Partial (or overflow) block: zero rows past the end.  Keep this
            # as a select (NOT a multiply) so NaN/Inf garbage is dropped.
            row_ids = b * tm + lax.broadcasted_iota(jnp.int32, diff.shape, 0)
            _accum(jnp.where(row_ids < total_rows, diff, 0.0))
    else:
        _accum(diff)


def l1_loss_pallas(out_img, gt_img, tm=None):
    """Mean absolute error between two same-shaped arrays, via Pallas."""
    assert out_img.shape == gt_img.shape
    n = out_img.size
    inv_n = 1.0 / float(n)

    x = out_img.reshape(-1)
    y = gt_img.reshape(-1)

    # Split off any sub-128 tail so the main body is a free (view) reshape;
    # the tail (< 128 elems) is summed in plain JAX.
    n_main = (n // _LANE) * _LANE
    tail_sum = jnp.float32(0.0)
    if n_main < n:
        xt = lax.slice(x, (n_main,), (n,))
        yt = lax.slice(y, (n_main,), (n,))
        tail_sum = jnp.sum(jnp.abs(xt.astype(jnp.float32) - yt.astype(jnp.float32)))
    if n_main == 0:
        return tail_sum * inv_n

    if n_main == n:
        xm = x.reshape(-1, _LANE)
        ym = y.reshape(-1, _LANE)
    else:
        xm = lax.slice(x, (0,), (n_main,)).reshape(-1, _LANE)
        ym = lax.slice(y, (0,), (n_main,)).reshape(-1, _LANE)
    rows = xm.shape[0]

    itemsize = int(jnp.dtype(xm.dtype).itemsize)
    # Sublane-packing granularity: f32 -> 8 rows, bf16 -> 16, int8/fp8 -> 32.
    base = _SUB * max(1, 4 // itemsize)

    kind = _device_kind()
    tm_default, vmem_limit, ncores_hint = _gen_config(kind)
    if tm is None:
        tm = tm_default

    # Clamp tile height for small inputs; keep it a multiple of the packing base.
    tm_eff = _round_up(min(tm, _round_up(rows, base)), base)

    nb = -(-rows // tm_eff)                       # total row blocks
    ncores = ncores_hint if nb >= ncores_hint else 1
    spc = -(-nb // ncores)                        # steps per core
    need_mask = (rows % tm_eff != 0) or (ncores * spc != nb)

    # Widest accumulator (in rows) that divides the tile -> more VALU ILP.
    acc_rows = _SUB
    for cand in (64, 32, 16, 8):
        if tm_eff % cand == 0:
            acc_rows = cand
            break

    if ncores * spc == nb:
        in_idx = lambda c, i: (c * spc + i, 0)
    else:
        # Clamp overflow steps of the last core to a valid block; their
        # contribution is zeroed by the in-kernel mask (row_ids >= rows).
        in_idx = lambda c, i: (jnp.minimum(c * spc + i, nb - 1), 0)

    kernel = functools.partial(
        _l1_sum_kernel, tm=tm_eff, total_rows=rows, steps_per_core=spc,
        acc_rows=acc_rows, need_mask=need_mask)

    partials = pl.pallas_call(
        kernel,
        out_shape=jax.ShapeDtypeStruct((ncores * acc_rows, _LANE), jnp.float32),
        grid_spec=pltpu.PrefetchScalarGridSpec(
            num_scalar_prefetch=0,
            grid=(ncores, spc),
            in_specs=[
                pl.BlockSpec((tm_eff, _LANE), in_idx),
                pl.BlockSpec((tm_eff, _LANE), in_idx),
            ],
            out_specs=pl.BlockSpec((acc_rows, _LANE), lambda c, i: (c, 0)),
        ),
        compiler_params=pltpu.CompilerParams(
            # Leading axis shards partial sums across TensorCores (v7x);
            # inner axis is the sequential reduction with the resident
            # output-block accumulator.
            dimension_semantics=("parallel", "arbitrary"),
            vmem_limit_bytes=vmem_limit,
        ),
        cost_estimate=pl.CostEstimate(
            flops=2 * n,
            transcendentals=0,
            bytes_accessed=2 * n * itemsize + ncores * acc_rows * _LANE * 4,
        ),
    )(xm, ym)

    # Single tiny cross-lane reduce of the per-core partial sums (<=16K elems)
    # done in plain JAX; negligible vs the HBM-bound kernel.
    main_sum = jnp.sum(partials)
    return (main_sum + tail_sum) * inv_n


class MyLossPallas:
    """Mirrors MyLoss.forward: dict-in / dict-out, mean L1 between
    out['image'] and gt['gt']."""

    def __call__(self, out, gt):
        l1 = l1_loss_pallas(out["image"], gt["gt"])
        return {"tot": l1, "L1": l1}


if __name__ == "__main__":
    key = jax.random.PRNGKey(0)
    k1, k2 = jax.random.split(key)
    # Small NCHW shapes consistent with an image loss: batch=2, channels=4, 16x16
    pred = jax.random.normal(k1, (2, 4, 16, 16), dtype=jnp.float32)
    target = jax.random.normal(k2, (2, 4, 16, 16), dtype=jnp.float32)

    loss_fn = MyLossPallas()
    result = loss_fn({"image": pred}, {"gt": target})
    jax.block_until_ready(result["tot"])

    ref = jnp.mean(jnp.abs(pred - target))
    assert jnp.allclose(result["tot"], ref, rtol=1e-5, atol=1e-5), (
        result["tot"], ref)
    assert jnp.allclose(result["L1"], result["tot"])

    # Non-aligned path: partial last block mask + sub-128 tail.
    k3, k4 = jax.random.split(k2)
    a = jax.random.normal(k3, (3, 3, 17, 11), dtype=jnp.float32)
    b = jax.random.normal(k4, (3, 3, 17, 11), dtype=jnp.float32)
    got = l1_loss_pallas(a, b)
    jax.block_until_ready(got)
    ref2 = jnp.mean(jnp.abs(a - b))
    assert jnp.allclose(got, ref2, rtol=1e-5, atol=1e-5), (got, ref2)

    # Multi-block paths (force tiny tiles so the grid has several steps):
    #  - aligned multi-block (no mask in the hot loop)
    got3 = l1_loss_pallas(pred, target, tm=8)
    jax.block_until_ready(got3)
    assert jnp.allclose(got3, ref, rtol=1e-5, atol=1e-5), (got3, ref)
    #  - odd block count (exercises the overflow/clamped-block path when the
    #    2-core split is active on v7x; plain multi-step accumulate elsewhere)
    k5, k6 = jax.random.split(k4)
    c = jax.random.normal(k5, (3, 4, 16, 16), dtype=jnp.float32)
    d = jax.random.normal(k6, (3, 4, 16, 16), dtype=jnp.float32)
    got4 = l1_loss_pallas(c, d, tm=8)
    jax.block_until_ready(got4)
    ref4 = jnp.mean(jnp.abs(c - d))
    assert jnp.allclose(got4, ref4, rtol=1e-5, atol=1e-5), (got4, ref4)

    # bf16 pass-through (halved HBM traffic; f32 accumulation in-kernel).
    pb = pred.astype(jnp.bfloat16)
    tb = target.astype(jnp.bfloat16)
    got5 = l1_loss_pallas(pb, tb)
    jax.block_until_ready(got5)
    ref5 = jnp.mean(jnp.abs(pb.astype(jnp.float32) - tb.astype(jnp.float32)))
    assert jnp.allclose(got5, ref5, rtol=1e-2, atol=1e-2), (got5, ref5)

    print("KERNEL_OK")
</pallas_src>

<mosaic_0001>
module attributes {stable_mosaic.version = 11 : i64} {
  func.func @_l1_sum_kernel(%arg0: i32, %arg1: i32, %arg2: memref<16x128xf32, #tpu.memory_space<vmem>>, %arg3: memref<16x128xf32, #tpu.memory_space<vmem>>, %arg4: memref<16x128xf32, #tpu.memory_space<vmem>>) attributes {dimension_semantics = [#tpu.dimension_semantics<parallel>, #tpu.dimension_semantics<arbitrary>], iteration_bounds = array<i64: 1, 1>, scalar_prefetch = 0 : i64, scratch_operands = 0 : i64, tpu.core_type = #tpu.core_type<tc>, window_params = [{transform_indices = @transform_0, window_bounds = array<i64: 16, 128>}, {transform_indices = @transform_1, window_bounds = array<i64: 16, 128>}, {transform_indices = @transform_2, window_bounds = array<i64: 16, 128>}]} {
    %c0_i32 = arith.constant 0 : i32
    %0 = arith.cmpi eq, %arg1, %c0_i32 : i32
    %1 = arith.extui %0 : i1 to i32
    %c0_i32_0 = arith.constant 0 : i32
    %2 = arith.cmpi ne, %1, %c0_i32_0 : i32
    scf.if %2 {
      %cst_8 = arith.constant 0.000000e+00 : f32
      %12 = vector.broadcast %cst_8 : f32 to vector<16x128xf32>
      %c0_9 = arith.constant 0 : index
      %c0_10 = arith.constant 0 : index
      %13 = vector.load %arg4[%c0_9, %c0_10] : memref<16x128xf32, #tpu.memory_space<vmem>>, vector<16x128xf32>
      tpu.vector_store %arg4[%c0_9, %c0_10], %12 {strides = array<i32>} : memref<16x128xf32, #tpu.memory_space<vmem>>, vector<16x128xf32>,
    } else {
    }
    %c0 = arith.constant 0 : index
    %c0_1 = arith.constant 0 : index
    %3 = vector.load %arg2[%c0, %c0_1] : memref<16x128xf32, #tpu.memory_space<vmem>>, vector<16x128xf32>
    %c0_2 = arith.constant 0 : index
    %c0_3 = arith.constant 0 : index
    %4 = vector.load %arg3[%c0_2, %c0_3] : memref<16x128xf32, #tpu.memory_space<vmem>>, vector<16x128xf32>
    %5 = arith.subf %3, %4 : vector<16x128xf32>
    %6 = math.absf %5 : vector<16x128xf32>
    %c0_4 = arith.constant 0 : index
    %c0_5 = arith.constant 0 : index
    %7 = vector.load %arg4[%c0_4, %c0_5] : memref<16x128xf32, #tpu.memory_space<vmem>>, vector<16x128xf32>
    %8 = vector.shape_cast %6 : vector<16x128xf32> to vector<1x16x128xf32>
    %cst = arith.constant dense<0.000000e+00> : vector<16x128xf32>
    %9 = vector.multi_reduction <add>, %8, %cst [0] : vector<1x16x128xf32> to vector<16x128xf32>
    %10 = arith.addf %7, %9 : vector<16x128xf32>
    %c0_6 = arith.constant 0 : index
    %c0_7 = arith.constant 0 : index
    %11 = vector.load %arg4[%c0_6, %c0_7] : memref<16x128xf32, #tpu.memory_space<vmem>>, vector<16x128xf32>
    tpu.vector_store %arg4[%c0_6, %c0_7], %10 {strides = array<i32>} : memref<16x128xf32, #tpu.memory_space<vmem>>, vector<16x128xf32>,
    return
  }
  func.func @transform_0(%arg0: i32, %arg1: i32) -> (i32, i32) {
    %c1_i32 = arith.constant 1 : i32
    %0 = arith.muli %arg0, %c1_i32 : i32
    %1 = arith.addi %0, %arg1 : i32
    %c0_i32 = arith.constant 0 : i32
    %c0_i32_0 = arith.constant 0 : i32
    return %1, %c0_i32 : i32, i32
  }
  func.func @transform_1(%arg0: i32, %arg1: i32) -> (i32, i32) {
    %c1_i32 = arith.constant 1 : i32
    %0 = arith.muli %arg0, %c1_i32 : i32
    %1 = arith.addi %0, %arg1 : i32
    %c0_i32 = arith.constant 0 : i32
    %c0_i32_0 = arith.constant 0 : i32
    return %1, %c0_i32 : i32, i32
  }
  func.func @transform_2(%arg0: i32, %arg1: i32) -> (i32, i32) {
    %c0_i32 = arith.constant 0 : i32
    %c0_i32_0 = arith.constant 0 : i32
    return %arg0, %c0_i32 : i32, i32
  }
}

</mosaic_0001>

<llo_original>
// kernel: tpu_custom_call.1
$region0: #{tpu_custom_call.1}
  #allocation0 [shape = 'u32[]', space=smem, size = 0x4, offset = 0x4, fixed_abs, tag = 'smem constant byte address 0x4 - core index']
  #allocation1 [shape = 'u32[144,128]{1,0:T(1,128)}', space=vmem, size = 0x12000, scoped, tag = 'internal scratch']
  %s0 = inlined_call_operand.hbm [shape: f32[16,128], index: 0, kind: input, shape index: {}]
  %s1 = inlined_call_operand.hbm [shape: f32[16,128], index: 1, kind: input, shape index: {}]
  %s2 = inlined_call_operand.hbm [shape: f32[16,128], index: 2, kind: output, shape index: {}]
  %s3 = sld [smem:[#allocation0]]
  $region30: #{tpu_custom_call.1} parent=0
    _
  %s5 = ssub.s32 1, %s3
  %s6 = scalar_select 0, %s5, %s3
  $region1: #{tpu_custom_call.1} parent=0
    #allocation2 [shape = 'u8[8192]{0}', space=vmem, size = 0x2000, scoped, tag = 'input window, operand 0, single buffered']
    #allocation3 [shape = 's32[1]{0}', space=sflag, size = 0x4, scoped, tag = 'scoped memory for tpu_custom_call.1']
    #allocation4 [shape = 's32[1]{0}', space=sflag, size = 0x4, scoped, tag = 'scoped memory for tpu_custom_call.1']
    #allocation5 [shape = 'u8[8192]{0}', space=vmem, size = 0x2000, scoped, tag = 'input window, operand 1, single buffered']
    #allocation6 [shape = 's32[1]{0}', space=sflag, size = 0x4, scoped, tag = 'scoped memory for tpu_custom_call.1']
    #allocation7 [shape = 'u8[8192]{0}', space=vmem, size = 0x2000, scoped, tag = 'output window, operand 0, single buffered']
    %7 = vsyncpa [#allocation3], 0
    %8 = vsyncpa [#allocation6], 0
    %9 = vsyncpa [#allocation4], 0
    // Predicated region
    $region2: #{tpu_custom_call.1} parent=1 // pred_check
      _
    $region3: #{tpu_custom_call.1} parent=1 // pred_check_branch
      %11 = sbr.rel (0) target = $region5
    $region4: #{tpu_custom_call.1} parent=1 // pred_region
      %s12 = sadd.s32 0, 0
      %s13 = smul.u32 2, %s12
      %s15 = ssub.s32 256, 256
      %16 = vsyncadd [#allocation3], %s15
      %s17 = smul.addr %s13, 128
      %s18 = scalar_lea.hbm %s0, %s17
      %s19 = sshll.u32 [#allocation2], 4
      %s20 = int_to_ptr.vmem [resolvable:$true] %s19
      %25 = dma.hbm_to_vmem [thread:$0]  %s18, 256, %s20, [#allocation3], 128, 128, 8
    $region5: #{tpu_custom_call.1} parent=1 // pred_fallthru
      _
    // Predicated region
    $region6: #{tpu_custom_call.1} parent=1 // pred_check
      _
    $region7: #{tpu_custom_call.1} parent=1 // pred_check_branch
      %27 = sbr.rel (0) target = $region9
    $region8: #{tpu_custom_call.1} parent=1 // pred_region
      %s28 = sadd.s32 0, 0
      %s29 = smul.u32 2, %s28
      %s31 = ssub.s32 256, 256
      %32 = vsyncadd [#allocation6], %s31
      %s33 = smul.addr %s29, 128
      %s34 = scalar_lea.hbm %s1, %s33
      %s35 = sshll.u32 [#allocation5], 4
      %s36 = int_to_ptr.vmem [resolvable:$true] %s35
      %41 = dma.hbm_to_vmem [thread:$0]  %s34, 256, %s36, [#allocation6], 128, 128, 8
    $region9: #{tpu_custom_call.1} parent=1 // pred_fallthru
      _
    // Predicated region
    $region10: #{tpu_custom_call.1} parent=1 // pred_check
      _
    $region11: #{tpu_custom_call.1} parent=1 // pred_check_branch
      %43 = sbr.rel (0) target = $region13
    $region12: #{tpu_custom_call.1} parent=1 // pred_region
      %44 = dma.done [#allocation3], 256
    $region13: #{tpu_custom_call.1} parent=1 // pred_fallthru
      _
    // Predicated region
    $region14: #{tpu_custom_call.1} parent=1 // pred_check
      _
    $region15: #{tpu_custom_call.1} parent=1 // pred_check_branch
      %46 = sbr.rel (0) target = $region17
    $region16: #{tpu_custom_call.1} parent=1 // pred_region
      %47 = dma.done [#allocation6], 256
    $region17: #{tpu_custom_call.1} parent=1 // pred_fallthru
      _
    %s48 = sadd.s32 0, 0
    %s49 = smul.u32 2, %s48
    %s50 = sadd.s32 0, 0
    %s51 = smul.u32 2, %s50
    %p52 = scmp.eq.s32.totalorder 0, 0
    // Predicated region
    $region18: #{tpu_custom_call.1} parent=1 // pred_check
      %p53 = pneg %p52
    $region19: #{tpu_custom_call.1} parent=1 // pred_check_branch
      %55 = sbr.rel (%p53) target = $region21
    $region20: #{tpu_custom_call.1} parent=1 // pred_region
      %56 = vst [vmem:[#allocation7] sm:$0xff] 0.0
      %57 = vst [vmem:[#allocation7 + $0x8] sm:$0xff] 0.0
    $region21: #{tpu_custom_call.1} parent=1 // pred_fallthru
      _
    %v58 = vld [vmem:[#allocation2] sm:$0xff]
    %v59 = vld [vmem:[#allocation2 + $0x8] sm:$0xff]
    %v60 = vld [vmem:[#allocation5] sm:$0xff]
    %v61 = vld [vmem:[#allocation5 + $0x8] sm:$0xff]
    %v62 = vsub.f32 %v58, %v60
    %v63 = vsub.f32 %v59, %v61
    %v64 = vand.u32 2147483647, %v62
    %v65 = vand.u32 2147483647, %v63
    %v66 = vld [vmem:[#allocation7] sm:$0xff]
    %v67 = vld [vmem:[#allocation7 + $0x8] sm:$0xff]
    %v68 = vadd.f32 %v64, 0.0
    %v69 = vadd.f32 %v65, 0.0
    %v70 = vadd.f32 %v66, %v68
    %v71 = vadd.f32 %v67, %v69
    %72 = vst [vmem:[#allocation7] sm:$0xff] %v70
    %73 = vst [vmem:[#allocation7 + $0x8] sm:$0xff] %v71
    // Predicated region
    $region22: #{tpu_custom_call.1} parent=1 // pred_check
      _
    $region23: #{tpu_custom_call.1} parent=1 // pred_check_branch
      %75 = sbr.rel (0) target = $region25
    $region24: #{tpu_custom_call.1} parent=1 // pred_region
      %s77 = ssub.s32 256, 256
      %78 = vsyncadd [#allocation4], %s77
      %s79 = sshll.u32 [#allocation7], 4
      %s80 = int_to_ptr.vmem [resolvable:$true] %s79
      %85 = dma.vmem_to_hbm [thread:$0]  %s80, 256, %s2, [#allocation4], 128, 128, 8
    $region25: #{tpu_custom_call.1} parent=1 // pred_fallthru
      _
    // Predicated region
    $region26: #{tpu_custom_call.1} parent=1 // pred_check
      _
    $region27: #{tpu_custom_call.1} parent=1 // pred_check_branch
      %87 = sbr.rel (0) target = $region29
    $region28: #{tpu_custom_call.1} parent=1 // pred_region
      %88 = dma.done [#allocation4], 256
    $region29: #{tpu_custom_call.1} parent=1 // pred_fallthru
      _
    %89 = vsyncpa [#allocation3], 1
    %90 = vsyncpa [#allocation6], 1
    %91 = vsyncpa [#allocation4], 1

</llo_original>
